<compile_context>
chip_gen: v7x
topology: tpu7x:2x2x1
jax: 0.10.0
libtpu: 0.0.40
codegen_flags: <defaults>
</compile_context>

<pallas_src>
import jax
import jax.numpy as jnp
from jax import lax
from jax.experimental import pallas as pl
from jax.experimental.pallas import tpu as pltpu


def _round_up(x, m):
    return ((x + m - 1) // m) * m


def _padded_tile_bytes(rows, cols, dtype):
    """VMEM footprint of a (rows, cols) tile after (8, 128) layout padding."""
    r = _round_up(max(int(rows), 1), 8)
    c = _round_up(max(int(cols), 1), 128)
    return r * c * jnp.dtype(dtype).itemsize


def _tpu_generation():
    """(num_tensorcores, per-core VMEM capacity), derived from device_kind so v7x
    (2 TCs, 64 MiB VMEM/TC) is sized differently from 1-TC / 128 MiB v5e/v6e."""
    kind = getattr(jax.devices()[0], "device_kind", "").lower()
    is_v7 = ("v7" in kind) or ("tpu7" in kind)
    num_tc = 2 if is_v7 else 1
    vmem_cap = (64 << 20) if is_v7 else (128 << 20)
    return num_tc, vmem_cap


# --------------------------------------------------------------------------- #
# Path A: VMEM-resident table, one-hot MXU gather (small vocabularies).        #
# --------------------------------------------------------------------------- #
def _onehot_mlp_kernel(ids_ref,            # VMEM (TM, 1) int32
                       table_ref,          # VMEM (V, E) resident embedding table
                       w1_ref, b1_ref,     # (E, H1), (1, H1) f32
                       w2_ref, b2_ref,     # (H1, H2), (1, H2) f32
                       o_ref):             # (TM, H2)
    v = table_ref.shape[0]
    tm = ids_ref.shape[0]
    dt = w1_ref.dtype

    ids = ids_ref[...]                                           # (TM, 1) int32
    cols = lax.broadcasted_iota(jnp.int32, (tm, v), 1)           # (TM, V)
    onehot = jnp.where(cols == ids, 1.0, 0.0).astype(dt)         # exact in bf16/f32

    # Gather == one-hot matmul on the MXU; no per-token DMAs at all.
    x = jnp.dot(onehot, table_ref[...].astype(dt),
                preferred_element_type=jnp.float32)              # (TM, E) f32
    h = jnp.dot(x.astype(dt), w1_ref[...], preferred_element_type=jnp.float32)
    h = jnp.maximum(h + b1_ref[...], 0.0)                        # ReLU; Dropout=id (eval)
    y = jnp.dot(h.astype(w2_ref.dtype), w2_ref[...],
                preferred_element_type=jnp.float32)
    # NOTE: H2 < 128 means lane-masked stores; only pad the output to 128 lanes
    # if profiling shows the store slot binding (8x extra bytes for tiny H2).
    o_ref[...] = (y + b2_ref[...]).astype(o_ref.dtype)


# --------------------------------------------------------------------------- #
# Path B: HBM table, per-row DMA gather, double-buffered across grid steps.    #
# --------------------------------------------------------------------------- #
_GATHER_UNROLL = 8   # rows per statically-unrolled chunk of descriptor pushes


def _dma_gather_mlp_kernel(ids_smem,           # SMEM scalar prefetch: (N_pad,) int32
                           embed_hbm,          # ANY/HBM: (V, E) embedding table
                           w1_ref, b1_ref,     # (E, H1), (1, H1)
                           w2_ref, b2_ref,     # (H1, H2), (1, H2)
                           o_ref,              # (TM, H2)
                           x_vmem,             # VMEM scratch (2, TM, E) double buffer
                           sem):               # DMA semaphores (2,)
    tm = x_vmem.shape[1]
    i = pl.program_id(0)
    nt = pl.num_programs(0)
    slot = i % 2

    def start_gather(tile_idx, dst_slot):
        base = tile_idx * tm

        def chunk(c, carry):
            r0 = c * _GATHER_UNROLL
            # Static unroll: scalar id reads / address math co-issue with the
            # descriptor pushes instead of one descriptor per loop iteration.
            for u in range(_GATHER_UNROLL):
                r = r0 + u
                row = ids_smem[base + r]
                pltpu.make_async_copy(
                    embed_hbm.at[pl.ds(row, 1)],
                    x_vmem.at[dst_slot, pl.ds(r, 1)],
                    sem.at[dst_slot],
                ).start()
            return carry

        lax.fori_loop(0, tm // _GATHER_UNROLL, chunk, 0)

    # Prime the pipeline on the first grid step (axis is "arbitrary" => sequential).
    @pl.when(i == 0)
    def _():
        start_gather(0, 0)

    # Kick off tile i+1's gather into the other slot BEFORE waiting/computing,
    # so the HBM row-gather latency hides under the MXU work below.
    @pl.when(i + 1 < nt)
    def _():
        start_gather(i + 1, 1 - slot)

    # One wait whose descriptor covers the whole (TM, E) tile: DMA semaphores
    # count bytes, so this matches the TM per-row copies exactly and replaces
    # TM scalar wait iterations.  (Wrapper guarantees TM <= V for the slice.)
    pltpu.make_async_copy(embed_hbm.at[pl.ds(0, tm)],
                          x_vmem.at[slot],
                          sem.at[slot]).wait()

    x = x_vmem[slot].astype(w1_ref.dtype)
    h = jnp.dot(x, w1_ref[...], preferred_element_type=jnp.float32)
    h = jnp.maximum(h + b1_ref[...], 0.0)                        # ReLU; Dropout=id (eval)
    y = jnp.dot(h.astype(w2_ref.dtype), w2_ref[...],
                preferred_element_type=jnp.float32)
    o_ref[...] = (y + b2_ref[...]).astype(o_ref.dtype)


# --------------------------------------------------------------------------- #
# Wrapper                                                                      #
# --------------------------------------------------------------------------- #
def mlp_fused_forward(token_ids_flat, embed, w1, b1, w2, b2, *,
                      tm=256, out_dtype=jnp.float32,
                      onehot_vocab_limit=2048, vmem_limit_bytes=None):
    """Fused Embedding-gather -> Linear -> ReLU -> Linear on (N,) token ids."""
    n = token_ids_flat.shape[0]
    v, e = embed.shape
    h1 = w1.shape[1]
    h2 = w2.shape[1]
    wdt = w1.dtype
    num_tc, vmem_cap = _tpu_generation()

    # ---- Row tile (generation-aware). On 1-TC parts the grid is a serial loop,
    #      so never shrink the tile just to create extra grid steps. ------------
    tm = _round_up(max(8, min(tm, _round_up(n, 8))), 8)
    if num_tc > 1:
        tm = max(8, min(tm, _round_up(pl.cdiv(n, num_tc), 8)))

    # ---- Gather strategy. ------------------------------------------------------
    table_resident_bytes = 2 * _padded_tile_bytes(v, e, embed.dtype)  # dbl-buffered alloc
    use_onehot = (v <= onehot_vocab_limit
                  and table_resident_bytes <= vmem_cap // 4)
    if not use_onehot:
        # Collapsed wait descriptor slices TM rows off the HBM table -> keep TM <= V
        # (always true for realistic vocabularies on this path).
        tm = max(8, min(tm, (v // 8) * 8))

    num_tiles = pl.cdiv(n, tm)
    n_pad = num_tiles * tm

    ids = token_ids_flat.astype(jnp.int32)
    if n_pad != n:
        # Only the tiny int32 id vector is padded; pad rows select row 0 and are
        # sliced off afterwards.  The (N, E) activation slab never exists in HBM.
        ids = jnp.pad(ids, (0, n_pad - n))

    b1_2d = b1.reshape(1, h1).astype(jnp.float32)
    b2_2d = b2.reshape(1, h2).astype(jnp.float32)

    # ---- Exact VMEM accounting ((8,128)-padded tiles; weights are copied once,
    #      but the pipeline still allocates them double-buffered). ---------------
    weight_bytes = 2 * (_padded_tile_bytes(e, h1, wdt)
                        + _padded_tile_bytes(1, h1, jnp.float32)
                        + _padded_tile_bytes(h1, h2, wdt)
                        + _padded_tile_bytes(1, h2, jnp.float32))
    out_bytes = 2 * _padded_tile_bytes(tm, h2, out_dtype)
    if use_onehot:
        extra = 2 * _padded_tile_bytes(tm, 1, jnp.int32) + table_resident_bytes
    else:
        extra = 2 * _padded_tile_bytes(tm, e, embed.dtype)   # (2, TM, E) scratch
    need = weight_bytes + out_bytes + extra
    if vmem_limit_bytes is None:
        vmem_limit_bytes = int(max(16 << 20, min(need + (4 << 20), (vmem_cap * 3) // 4)))

    flops = 2 * n_pad * e * h1 + 2 * n_pad * h1 * h2
    if use_onehot:
        flops += 2 * n_pad * v * e
    cost = pl.CostEstimate(
        flops=flops, transcendentals=0,
        bytes_accessed=(n_pad * e * jnp.dtype(embed.dtype).itemsize
                        + (e * h1 + h1 * h2) * jnp.dtype(wdt).itemsize
                        + (h1 + h2) * 4
                        + n_pad * h2 * jnp.dtype(out_dtype).itemsize
                        + n_pad * 4))

    if use_onehot:
        grid_spec = pltpu.PrefetchScalarGridSpec(
            num_scalar_prefetch=0,
            grid=(num_tiles,),
            in_specs=[
                pl.BlockSpec((tm, 1), lambda i: (i, 0)),     # token ids
                pl.BlockSpec((v, e), lambda i: (0, 0)),      # resident table
                pl.BlockSpec((e, h1), lambda i: (0, 0)),     # W1 resident
                pl.BlockSpec((1, h1), lambda i: (0, 0)),     # b1
                pl.BlockSpec((h1, h2), lambda i: (0, 0)),    # W2 resident
                pl.BlockSpec((1, h2), lambda i: (0, 0)),     # b2
            ],
            out_specs=pl.BlockSpec((tm, h2), lambda i: (i, 0)),
        )
        out = pl.pallas_call(
            _onehot_mlp_kernel,
            out_shape=jax.ShapeDtypeStruct((n_pad, h2), out_dtype),
            grid_spec=grid_spec,
            compiler_params=pltpu.CompilerParams(
                dimension_semantics=("parallel",),
                vmem_limit_bytes=vmem_limit_bytes),
            cost_estimate=cost,
        )(ids.reshape(n_pad, 1), embed, w1, b1_2d, w2, b2_2d)
    else:
        grid_spec = pltpu.PrefetchScalarGridSpec(
            num_scalar_prefetch=1,                           # ids -> SMEM
            grid=(num_tiles,),
            in_specs=[
                pl.BlockSpec(memory_space=pl.ANY),           # table stays in HBM
                pl.BlockSpec((e, h1), lambda i, ids_ref: (0, 0)),
                pl.BlockSpec((1, h1), lambda i, ids_ref: (0, 0)),
                pl.BlockSpec((h1, h2), lambda i, ids_ref: (0, 0)),
                pl.BlockSpec((1, h2), lambda i, ids_ref: (0, 0)),
            ],
            out_specs=pl.BlockSpec((tm, h2), lambda i, ids_ref: (i, 0)),
            scratch_shapes=[
                pltpu.VMEM((2, tm, e), embed.dtype),         # double-buffered gather tile
                pltpu.SemaphoreType.DMA((2,)),
            ],
        )
        out = pl.pallas_call(
            _dma_gather_mlp_kernel,
            out_shape=jax.ShapeDtypeStruct((n_pad, h2), out_dtype),
            grid_spec=grid_spec,
            compiler_params=pltpu.CompilerParams(
                # "arbitrary": the cross-step double-buffered gather (prime at
                # i==0, prefetch i+1 at step i) requires sequential grid order.
                dimension_semantics=("arbitrary",),
                vmem_limit_bytes=vmem_limit_bytes),
            cost_estimate=cost,
        )(ids, embed, w1, b1_2d, w2, b2_2d)

    return out[:n]


def model_wrapper_forward(token_ids, params, *, compute_dtype=jnp.float32,
                          tm=256, onehot_vocab_limit=2048):
    """Full ModelWrapper forward (eval mode).  With compute_dtype=bf16 the table
    and weights are cast OFFLINE, halving gathered/resident bytes on v6e/v7x and
    removing all in-kernel f32->bf16 casts of the table; accumulation stays f32."""
    b, s = token_ids.shape
    embed = params["embed"].astype(compute_dtype)
    w1 = params["w1"].astype(compute_dtype)
    w2 = params["w2"].astype(compute_dtype)
    y = mlp_fused_forward(token_ids.reshape(-1), embed, w1, params["b1"],
                          w2, params["b2"], tm=tm,
                          onehot_vocab_limit=onehot_vocab_limit)
    return y.reshape(b, s, -1)


def init_params(key, vocab, embed_dim, fc_sizes):
    assert fc_sizes[0] == embed_dim
    k_emb, k_w1, k_b1, k_w2, k_b2 = jax.random.split(key, 5)
    e, h1, h2 = fc_sizes

    def lin_init(kw, kb, fan_in, fan_out):
        bound = 1.0 / jnp.sqrt(fan_in)
        w = jax.random.uniform(kw, (fan_in, fan_out), jnp.float32, -bound, bound)
        b = jax.random.uniform(kb, (fan_out,), jnp.float32, -bound, bound)
        return w, b

    embed = jax.random.normal(k_emb, (vocab, embed_dim), jnp.float32)
    w1, b1 = lin_init(k_w1, k_b1, e, h1)
    w2, b2 = lin_init(k_w2, k_b2, h1, h2)
    return {"embed": embed, "w1": w1, "b1": b1, "w2": w2, "b2": b2}


if __name__ == "__main__":
    key = jax.random.PRNGKey(0)
    B, S = 2, 8          # batch, sequence
    V, E = 64, 32        # vocab size, embedding dim
    fc_sizes = [E, 64, 16]

    k_params, k_ids = jax.random.split(key)
    params = init_params(k_params, V, E, fc_sizes)
    token_ids = jax.random.randint(k_ids, (B, S), 0, V, dtype=jnp.int32)

    # Pure-JAX eval-mode reference (Dropout = identity).
    emb = jnp.take(params["embed"], token_ids.reshape(-1), axis=0)
    ref = (jnp.maximum(emb @ params["w1"] + params["b1"], 0.0) @ params["w2"]
           + params["b2"]).reshape(B, S, fc_sizes[-1])

    # --- 1) f32, small-vocab path: VMEM-resident table, one-hot MXU gather. ---
    out = jax.block_until_ready(model_wrapper_forward(token_ids, params))
    assert out.shape == (B, S, fc_sizes[-1])
    assert jnp.allclose(out, ref, atol=1e-4, rtol=1e-4)

    # --- 2) f32, forced HBM-table path: double-buffered per-row DMA gather. ---
    out_dma = jax.block_until_ready(
        model_wrapper_forward(token_ids, params, onehot_vocab_limit=0))
    assert out_dma.shape == (B, S, fc_sizes[-1])
    assert jnp.allclose(out_dma, ref, atol=1e-4, rtol=1e-4)

    # --- 3) bf16 table/weights (v6e/v7x MXU path), f32 accumulation. ----------
    out_bf16 = jax.block_until_ready(
        model_wrapper_forward(token_ids, params, compute_dtype=jnp.bfloat16))
    emb_b = emb.astype(jnp.bfloat16)
    h_b = jnp.maximum(
        jnp.dot(emb_b, params["w1"].astype(jnp.bfloat16),
                preferred_element_type=jnp.float32) + params["b1"], 0.0)
    ref_b = (jnp.dot(h_b.astype(jnp.bfloat16), params["w2"].astype(jnp.bfloat16),
                     preferred_element_type=jnp.float32) + params["b2"]
             ).reshape(B, S, fc_sizes[-1])
    assert jnp.allclose(out_bf16, ref_b, atol=5e-2, rtol=5e-2)

    print("KERNEL_OK")
</pallas_src>

<mosaic_0001>
module attributes {stable_mosaic.version = 11 : i64} {
  func.func @_onehot_mlp_kernel(%arg0: i32, %arg1: memref<16x1xi32, #tpu.memory_space<vmem>>, %arg2: memref<64x32xf32, #tpu.memory_space<vmem>>, %arg3: memref<32x64xf32, #tpu.memory_space<vmem>>, %arg4: memref<1x64xf32, #tpu.memory_space<vmem>>, %arg5: memref<64x16xf32, #tpu.memory_space<vmem>>, %arg6: memref<1x16xf32, #tpu.memory_space<vmem>>, %arg7: memref<16x16xf32, #tpu.memory_space<vmem>>) attributes {dimension_semantics = [#tpu.dimension_semantics<parallel>], iteration_bounds = array<i64: 1>, scalar_prefetch = 0 : i64, scratch_operands = 0 : i64, tpu.core_type = #tpu.core_type<tc>, window_params = [{transform_indices = @transform_0, window_bounds = array<i64: 16, 1>}, {pipeline_mode = #tpu.pipeline_mode<synchronous>, transform_indices = @transform_1, window_bounds = array<i64: 64, 32>}, {pipeline_mode = #tpu.pipeline_mode<synchronous>, transform_indices = @transform_2, window_bounds = array<i64: 32, 64>}, {pipeline_mode = #tpu.pipeline_mode<synchronous>, transform_indices = @transform_3, window_bounds = array<i64: 1, 64>}, {pipeline_mode = #tpu.pipeline_mode<synchronous>, transform_indices = @transform_4, window_bounds = array<i64: 64, 16>}, {pipeline_mode = #tpu.pipeline_mode<synchronous>, transform_indices = @transform_5, window_bounds = array<i64: 1, 16>}, {transform_indices = @transform_6, window_bounds = array<i64: 16, 16>}]} {
    %c0 = arith.constant 0 : index
    %c0_0 = arith.constant 0 : index
    %0 = vector.load %arg1[%c0, %c0_0] : memref<16x1xi32, #tpu.memory_space<vmem>>, vector<16x1xi32>
    %1 = tpu.iota {dimensions = array<i32: 1>} : vector<16x64xi32>
    %2 = vector.broadcast %0 : vector<16x1xi32> to vector<16x64xi32>
    %3 = arith.cmpi eq, %1, %2 : vector<16x64xi32>
    %cst = arith.constant 1.000000e+00 : f32
    %cst_1 = arith.constant 0.000000e+00 : f32
    %4 = vector.broadcast %cst : f32 to vector<16x64xf32>
    %5 = vector.broadcast %cst_1 : f32 to vector<16x64xf32>
    %6 = arith.select %3, %4, %5 : vector<16x64xi1>, vector<16x64xf32>
    %c0_2 = arith.constant 0 : index
    %c0_3 = arith.constant 0 : index
    %7 = vector.load %arg2[%c0_2, %c0_3] : memref<64x32xf32, #tpu.memory_space<vmem>>, vector<64x32xf32>
    %cst_4 = arith.constant dense<0.000000e+00> : vector<16x32xf32>
    %8 = tpu.matmul %6, %7, %cst_4 {dimension_numbers = #tpu.dot_dimension_numbers<[1], [0], [0], [1], [0, 0, 1, 1], [], []>} : vector<16x64xf32>, vector<64x32xf32>, vector<16x32xf32> -> vector<16x32xf32>
    %c0_5 = arith.constant 0 : index
    %c0_6 = arith.constant 0 : index
    %9 = vector.load %arg3[%c0_5, %c0_6] : memref<32x64xf32, #tpu.memory_space<vmem>>, vector<32x64xf32>
    %cst_7 = arith.constant dense<0.000000e+00> : vector<16x64xf32>
    %10 = tpu.matmul %8, %9, %cst_7 {dimension_numbers = #tpu.dot_dimension_numbers<[1], [0], [0], [1], [0, 0, 1, 1], [], []>} : vector<16x32xf32>, vector<32x64xf32>, vector<16x64xf32> -> vector<16x64xf32>
    %c0_8 = arith.constant 0 : index
    %c0_9 = arith.constant 0 : index
    %11 = vector.load %arg4[%c0_8, %c0_9] : memref<1x64xf32, #tpu.memory_space<vmem>>, vector<1x64xf32>
    %12 = vector.broadcast %11 : vector<1x64xf32> to vector<16x64xf32>
    %13 = arith.addf %10, %12 : vector<16x64xf32>
    %cst_10 = arith.constant 0.000000e+00 : f32
    %14 = vector.broadcast %cst_10 : f32 to vector<16x64xf32>
    %15 = arith.maximumf %13, %14 : vector<16x64xf32>
    %c0_11 = arith.constant 0 : index
    %c0_12 = arith.constant 0 : index
    %16 = vector.load %arg5[%c0_11, %c0_12] : memref<64x16xf32, #tpu.memory_space<vmem>>, vector<64x16xf32>
    %cst_13 = arith.constant dense<0.000000e+00> : vector<16x16xf32>
    %17 = tpu.matmul %15, %16, %cst_13 {dimension_numbers = #tpu.dot_dimension_numbers<[1], [0], [0], [1], [0, 0, 1, 1], [], []>} : vector<16x64xf32>, vector<64x16xf32>, vector<16x16xf32> -> vector<16x16xf32>
    %c0_14 = arith.constant 0 : index
    %c0_15 = arith.constant 0 : index
    %18 = vector.load %arg6[%c0_14, %c0_15] : memref<1x16xf32, #tpu.memory_space<vmem>>, vector<1x16xf32>
    %19 = vector.broadcast %18 : vector<1x16xf32> to vector<16x16xf32>
    %20 = arith.addf %17, %19 : vector<16x16xf32>
    %c0_16 = arith.constant 0 : index
    %c0_17 = arith.constant 0 : index
    %21 = vector.load %arg7[%c0_16, %c0_17] : memref<16x16xf32, #tpu.memory_space<vmem>>, vector<16x16xf32>
    tpu.vector_store %arg7[%c0_16, %c0_17], %20 {strides = array<i32>} : memref<16x16xf32, #tpu.memory_space<vmem>>, vector<16x16xf32>,
    return
  }
  func.func @transform_0(%arg0: i32) -> (i32, i32) {
    %c0_i32 = arith.constant 0 : i32
    %c0_i32_0 = arith.constant 0 : i32
    return %arg0, %c0_i32 : i32, i32
  }
  func.func @transform_1(%arg0: i32) -> (i32, i32) {
    %c0_i32 = arith.constant 0 : i32
    %c0_i32_0 = arith.constant 0 : i32
    %c0_i32_1 = arith.constant 0 : i32
    return %c0_i32, %c0_i32_0 : i32, i32
  }
  func.func @transform_2(%arg0: i32) -> (i32, i32) {
    %c0_i32 = arith.constant 0 : i32
    %c0_i32_0 = arith.constant 0 : i32
    %c0_i32_1 = arith.constant 0 : i32
    return %c0_i32, %c0_i32_0 : i32, i32
  }
  func.func @transform_3(%arg0: i32) -> (i32, i32) {
    %c0_i32 = arith.constant 0 : i32
    %c0_i32_0 = arith.constant 0 : i32
    %c0_i32_1 = arith.constant 0 : i32
    return %c0_i32, %c0_i32_0 : i32, i32
  }
  func.func @transform_4(%arg0: i32) -> (i32, i32) {
    %c0_i32 = arith.constant 0 : i32
    %c0_i32_0 = arith.constant 0 : i32
    %c0_i32_1 = arith.constant 0 : i32
    return %c0_i32, %c0_i32_0 : i32, i32
  }
  func.func @transform_5(%arg0: i32) -> (i32, i32) {
    %c0_i32 = arith.constant 0 : i32
    %c0_i32_0 = arith.constant 0 : i32
    %c0_i32_1 = arith.constant 0 : i32
    return %c0_i32, %c0_i32_0 : i32, i32
  }
  func.func @transform_6(%arg0: i32) -> (i32, i32) {
    %c0_i32 = arith.constant 0 : i32
    %c0_i32_0 = arith.constant 0 : i32
    return %arg0, %c0_i32 : i32, i32
  }
}

</mosaic_0001>

<llo_original>
// kernel: tpu_custom_call.1
$region0: #{tpu_custom_call.1}
  #allocation0 [shape = 'u32[]', space=smem, size = 0x4, offset = 0x4, fixed_abs, tag = 'smem constant byte address 0x4 - core index']
  #allocation1 [shape = 'u32[144,128]{1,0:T(1,128)}', space=vmem, size = 0x12000, scoped, tag = 'internal scratch']
  %s0 = inlined_call_operand.vmem [shape: s32[16,1], index: 0, kind: input, shape index: {}]
  %s1 = inlined_call_operand.vmem [shape: f32[64,32], index: 1, kind: input, shape index: {}]
  %s2 = inlined_call_operand.vmem [shape: f32[32,64], index: 2, kind: input, shape index: {}]
  %s3 = inlined_call_operand.vmem [shape: f32[1,64], index: 3, kind: input, shape index: {}]
  %s4 = inlined_call_operand.vmem [shape: f32[64,16], index: 4, kind: input, shape index: {}]
  %s5 = inlined_call_operand.vmem [shape: f32[1,16], index: 5, kind: input, shape index: {}]
  %s6 = inlined_call_operand.hbm [shape: f32[16,16], index: 6, kind: output, shape index: {}]
  %s7 = sld [smem:[#allocation0]]
  $region34: #{tpu_custom_call.1} parent=0
    _
  %s9 = ssub.s32 1, %s7
  %s10 = scalar_select 0, %s9, %s7
  $region1: #{tpu_custom_call.1} parent=0
    #allocation2 [shape = 'u8[8192]{0}', space=vmem, size = 0x2000, scoped, tag = 'output window, operand 0, single buffered']
    #allocation3 [shape = 's32[1]{0}', space=sflag, size = 0x4, scoped, tag = 'scoped memory for tpu_custom_call.1']
    %11 = vsyncpa [#allocation3], 0
    // Predicated region
    $region2: #{tpu_custom_call.1} parent=1 // pred_check
      _
    $region3: #{tpu_custom_call.1} parent=1 // pred_check_branch
      %13 = sbr.rel (0) target = $region5
    $region4: #{tpu_custom_call.1} parent=1 // pred_region
      _
    $region5: #{tpu_custom_call.1} parent=1 // pred_fallthru
      _
    // Predicated region
    $region6: #{tpu_custom_call.1} parent=1 // pred_check
      _
    $region7: #{tpu_custom_call.1} parent=1 // pred_check_branch
      %15 = sbr.rel (0) target = $region9
    $region8: #{tpu_custom_call.1} parent=1 // pred_region
      _
    $region9: #{tpu_custom_call.1} parent=1 // pred_fallthru
      _
    // Predicated region
    $region10: #{tpu_custom_call.1} parent=1 // pred_check
      _
    $region11: #{tpu_custom_call.1} parent=1 // pred_check_branch
      %17 = sbr.rel (0) target = $region13
    $region12: #{tpu_custom_call.1} parent=1 // pred_region
      _
    $region13: #{tpu_custom_call.1} parent=1 // pred_fallthru
      _
    // Predicated region
    $region14: #{tpu_custom_call.1} parent=1 // pred_check
      _
    $region15: #{tpu_custom_call.1} parent=1 // pred_check_branch
      %19 = sbr.rel (0) target = $region17
    $region16: #{tpu_custom_call.1} parent=1 // pred_region
      _
    $region17: #{tpu_custom_call.1} parent=1 // pred_fallthru
      _
    // Predicated region
    $region18: #{tpu_custom_call.1} parent=1 // pred_check
      _
    $region19: #{tpu_custom_call.1} parent=1 // pred_check_branch
      %21 = sbr.rel (0) target = $region21
    $region20: #{tpu_custom_call.1} parent=1 // pred_region
      _
    $region21: #{tpu_custom_call.1} parent=1 // pred_fallthru
      _
    // Predicated region
    $region22: #{tpu_custom_call.1} parent=1 // pred_check
      _
    $region23: #{tpu_custom_call.1} parent=1 // pred_check_branch
      %23 = sbr.rel (0) target = $region25
    $region24: #{tpu_custom_call.1} parent=1 // pred_region
      _
    $region25: #{tpu_custom_call.1} parent=1 // pred_fallthru
      _
    %v24 = vld [vmem:[%s0] sm:$0xff]
    %v25 = vld [vmem:[%s0 + $0x8] sm:$0xff]
    %v26 = vlaneseq
    %v27 = vand.u32 %v26, 127
    %28 = vset.pattern.permute.xlu0 0
    %29 = vperm.xlu0 %28, %v24
    %v30 = vpop.permute.xlu0 %29
    %31 = vset.pattern.permute.xlu0 0
    %32 = vperm.xlu0 %31, %v25
    %v33 = vpop.permute.xlu0 %32
    %vm34 = vcmp.eq.s32.totalorder %v27, %v30
    %vm35 = vcmp.eq.s32.totalorder %v27, %v33
    %v36 = vsel %vm34, 1.0, 0.0
    %v37 = vsel %vm35, 1.0, 0.0
    %v38 = vld [vmem:[%s1] sm:$0xff]
    %v39 = vld [vmem:[%s1 + $0x8] sm:$0xff]
    %v40 = vld [vmem:[%s1 + $0x10] sm:$0xff]
    %v41 = vld [vmem:[%s1 + $0x18] sm:$0xff]
    %v42 = vld [vmem:[%s1 + $0x20] sm:$0xff]
    %v43 = vld [vmem:[%s1 + $0x28] sm:$0xff]
    %v44 = vld [vmem:[%s1 + $0x30] sm:$0xff]
    %v45 = vld [vmem:[%s1 + $0x38] sm:$0xff]
    %vm46 = vcmask 523264
    %v48 = vsel %vm46, %v36, 0
    %v51 = vsel %vm46, %v37, 0
    %53 = vmatprep.subr.mxu0 0.0
    %54 = vmatpush1.msra.mxu0 %v38
    %55 = vmatprep.subr.mxu0 0.0
    %56 = vmatpush1.msra.mxu0 %v39
    %57 = vmatprep.subr.mxu0 0.0
    %58 = vmatpush1.msra.mxu0 %v40
    %59 = vmatprep.subr.mxu0 0.0
    %60 = vmatpush1.msra.mxu0 %v41
    %61 = vmatprep.subr.mxu0 0.0
    %62 = vmatpush1.msra.mxu0 %v42
    %63 = vmatprep.subr.mxu0 0.0
    %64 = vmatpush1.msra.mxu0 %v43
    %65 = vmatprep.subr.mxu0 0.0
    %66 = vmatpush1.msra.mxu0 %v44
    %67 = vmatprep.subr.mxu0 0.0
    %68 = vmatpush1.msra.mxu0 %v45
    %69 = vmatprep.subr.mxu0 0.0
    %70 = vmatpush1.msra.mxu0 0.0
    %71 = vmatprep.subr.mxu0 0.0
    %72 = vmatpush1.msra.mxu0 0.0
    %73 = vmatprep.subr.mxu0 0.0
    %74 = vmatpush1.msra.mxu0 0.0
    %75 = vmatprep.subr.mxu0 0.0
    %76 = vmatpush1.msra.mxu0 0.0
    %77 = vmatprep.subr.mxu0 0.0
    %78 = vmatpush1.msra.mxu0 0.0
    %79 = vmatprep.subr.mxu0 0.0
    %80 = vmatpush1.msra.mxu0 0.0
    %81 = vmatprep.subr.mxu0 0.0
    %82 = vmatpush1.msra.mxu0 0.0
    %83 = vmatprep.subr.mxu0 0.0
    %84 = vmatpush1.msra.mxu0 0.0
    %85 = vmatprep.subr.mxu0 0.0
    %86 = vmatpush1.msra.mxu0 0.0
    %87 = vmatprep.subr.mxu0 0.0
    %88 = vmatpush1.msra.mxu0 0.0
    %89 = vmatprep.subr.mxu0 0.0
    %90 = vmatpush1.msra.mxu0 0.0
    %91 = vmatprep.subr.mxu0 0.0
    %92 = vmatpush1.msra.mxu0 0.0
    %93 = vmatprep.subr.mxu0 0.0
    %94 = vmatpush1.msra.mxu0 0.0
    %95 = vmatprep.subr.mxu0 0.0
    %96 = vmatpush1.msra.mxu0 0.0
    %97 = vmatprep.subr.mxu0 0.0
    %98 = vmatpush1.msra.mxu0 0.0
    %99 = vmatprep.subr.mxu0 0.0
    %100 = vmatpush1.msra.mxu0 0.0
    %101 = vmatprep.subr.mxu0 0.0
    %102 = vmatpush1.msra.mxu0 0.0
    %103 = vmatprep.subr.mxu0 0.0
    %104 = vmatpush1.msra.mxu0 0.0
    %105 = vmatprep.subr.mxu0 0.0
    %106 = vmatpush1.msra.mxu0 0.0
    %107 = vmatprep.subr.mxu0 0.0
    %108 = vmatpush1.msra.mxu0 0.0
    %109 = vmatprep.subr.mxu0 0.0
    %110 = vmatpush1.msra.mxu0 0.0
    %111 = vmatprep.subr.mxu0 0.0
    %112 = vmatpush1.msra.mxu0 0.0
    %113 = vmatprep.subr.mxu0 0.0
    %114 = vmatpush1.msra.mxu0 0.0
    %115 = vmatprep.subr.mxu0 0.0
    %116 = vmatpush1.msra.mxu0 0.0
    %117 = vmatprep.mubr.f32.mxu0 0.0
    %118 = vmatmul.mubr.f32.gmra.mrb[0].mxu0 %v48
    %v119 = vpop.f32.mrb[0].mxu0
    %v120 = vadd.f32 0.0, %v119
    %v121 = vpop.f32.mrb[0].mxu0
    %122 = vmatprep.mubr.f32.mxu0 0.0
    %123 = vmatmul.mubr.f32.gmra.mrb[0].mxu0 %v51
    %v124 = vpop.f32.mrb[0].mxu0
    %v125 = vadd.f32 0.0, %v124
    %v126 = vpop.f32.mrb[0].mxu0
    %127 = vdwg.mxu0
    %v128 = vld [vmem:[%s2] sm:$0xff]
    %v129 = vld [vmem:[%s2 + $0x8] sm:$0xff]
    %v130 = vld [vmem:[%s2 + $0x10] sm:$0xff]
    %v131 = vld [vmem:[%s2 + $0x18] sm:$0xff]
    %v132 = vld [vmem:[%s3] sm:$0x1]
    %v134 = vlaneseq
    %v135 = vshrl.u32 %v134, 7
    %v136 = vsub.s32 0, %v135
    %v137 = vrot.slane %v132, %v136
    %vm139 = vcmask 261120
    %v141 = vsel %vm139, %v120, 0
    %v144 = vsel %vm139, %v125, 0
    %146 = vmatprep.subr.mxu0 0.0
    %147 = vmatpush1.msra.mxu0 %v128
    %148 = vmatprep.subr.mxu0 0.0
    %149 = vmatpush1.msra.mxu0 %v129
    %150 = vmatprep.subr.mxu0 0.0
    %151 = vmatpush1.msra.mxu0 %v130
    %152 = vmatprep.subr.mxu0 0.0
    %153 = vmatpush1.msra.mxu0 %v131
    %154 = vmatprep.subr.mxu0 0.0
    %155 = vmatpush1.msra.mxu0 0.0
    %156 = vmatprep.subr.mxu0 0.0
    %157 = vmatpush1.msra.mxu0 0.0
    %158 = vmatprep.subr.mxu0 0.0
    %159 = vmatpush1.msra.mxu0 0.0
    %160 = vmatprep.subr.mxu0 0.0
    %161 = vmatpush1.msra.mxu0 0.0
    %162 = vmatprep.subr.mxu0 0.0
    %163 = vmatpush1.msra.mxu0 0.0
    %164 = vmatprep.subr.mxu0 0.0
    %165 = vmatpush1.msra.mxu0 0.0
    %166 = vmatprep.subr.mxu0 0.0
    %167 = vmatpush1.msra.mxu0 0.0
    %168 = vmatprep.subr.mxu0 0.0
    %169 = vmatpush1.msra.mxu0 0.0
    %170 = vmatprep.subr.mxu0 0.0
    %171 = vmatpush1.msra.mxu0 0.0
    %172 = vmatprep.subr.mxu0 0.0
    %173 = vmatpush1.msra.mxu0 0.0
    %174 = vmatprep.subr.mxu0 0.0
    %175 = vmatpush1.msra.mxu0 0.0
    %176 = vmatprep.subr.mxu0 0.0
    %177 = vmatpush1.msra.mxu0 0.0
    %178 = vmatprep.subr.mxu0 0.0
    %179 = vmatpush1.msra.mxu0 0.0
    %180 = vmatprep.subr.mxu0 0.0
    %181 = vmatpush1.msra.mxu0 0.0
    %182 = vmatprep.subr.mxu0 0.0
    %183 = vmatpush1.msra.mxu0 0.0
    %184 = vmatprep.subr.mxu0 0.0
    %185 = vmatpush1.msra.mxu0 0.0
    %186 = vmatprep.subr.mxu0 0.0
    %187 = vmatpush1.msra.mxu0 0.0
    %188 = vmatprep.subr.mxu0 0.0
    %189 = vmatpush1.msra.mxu0 0.0
    %190 = vmatprep.subr.mxu0 0.0
    %191 = vmatpush1.msra.mxu0 0.0
    %192 = vmatprep.subr.mxu0 0.0
    %193 = vmatpush1.msra.mxu0 0.0
    %194 = vmatprep.subr.mxu0 0.0
    %195 = vmatpush1.msra.mxu0 0.0
    %196 = vmatprep.subr.mxu0 0.0
    %197 = vmatpush1.msra.mxu0 0.0
    %198 = vmatprep.subr.mxu0 0.0
    %199 = vmatpush1.msra.mxu0 0.0
    %200 = vmatprep.subr.mxu0 0.0
    %201 = vmatpush1.msra.mxu0 0.0
    %202 = vmatprep.subr.mxu0 0.0
    %203 = vmatpush1.msra.mxu0 0.0
    %204 = vmatprep.subr.mxu0 0.0
    %205 = vmatpush1.msra.mxu0 0.0
    %206 = vmatprep.subr.mxu0 0.0
    %207 = vmatpush1.msra.mxu0 0.0
    %208 = vmatprep.subr.mxu0 0.0
    %209 = vmatpush1.msra.mxu0 0.0
    %210 = vmatprep.mubr.f32.mxu0 0.0
    %211 = vmatmul.mubr.f32.gmra.mrb[0].mxu0 %v141
    %v212 = vpop.f32.mrb[0].mxu0
    %v213 = vadd.f32 %v137, %v212
    %v214 = vpop.f32.mrb[0].mxu0
    %215 = vmatprep.mubr.f32.mxu0 0.0
    %216 = vmatmul.mubr.f32.gmra.mrb[0].mxu0 %v144
    %v217 = vpop.f32.mrb[0].mxu0
    %v218 = vadd.f32 %v137, %v217
    %v219 = vpop.f32.mrb[0].mxu0
    %220 = vdwg.mxu0
    %v221 = vmax.f32 %v213, 0.0
    %v222 = vmax.f32 %v218, 0.0
    %v223 = vld [vmem:[%s4] sm:$0xff]
    %v224 = vld [vmem:[%s4 + $0x8] sm:$0xff]
    %v225 = vld [vmem:[%s4 + $0x10] sm:$0xff]
    %v226 = vld [vmem:[%s4 + $0x18] sm:$0xff]
    %v227 = vld [vmem:[%s4 + $0x20] sm:$0xff]
    %v228 = vld [vmem:[%s4 + $0x28] sm:$0xff]
    %v229 = vld [vmem:[%s4 + $0x30] sm:$0xff]
    %v230 = vld [vmem:[%s4 + $0x38] sm:$0xff]
    %v231 = vld [vmem:[%s5] sm:$0x1]
    %v233 = vlaneseq
    %v234 = vshrl.u32 %v233, 7
    %v235 = vsub.s32 0, %v234
    %v236 = vrot.slane %v231, %v235
    %v239 = vsel %vm46, %v221, 0
    %v242 = vsel %vm46, %v222, 0
    %244 = vmatprep.subr.mxu0 0.0
    %245 = vmatpush1.msra.mxu0 %v223
    %246 = vmatprep.subr.mxu0 0.0
    %247 = vmatpush1.msra.mxu0 %v224
    %248 = vmatprep.subr.mxu0 0.0
    %249 = vmatpush1.msra.mxu0 %v225
    %250 = vmatprep.subr.mxu0 0.0
    %251 = vmatpush1.msra.mxu0 %v226
    %252 = vmatprep.subr.mxu0 0.0
    %253 = vmatpush1.msra.mxu0 %v227
    %254 = vmatprep.subr.mxu0 0.0
    %255 = vmatpush1.msra.mxu0 %v228
    %256 = vmatprep.subr.mxu0 0.0
    %257 = vmatpush1.msra.mxu0 %v229
    %258 = vmatprep.subr.mxu0 0.0
    %259 = vmatpush1.msra.mxu0 %v230
    %260 = vmatprep.subr.mxu0 0.0
    %261 = vmatpush1.msra.mxu0 0.0
    %262 = vmatprep.subr.mxu0 0.0
    %263 = vmatpush1.msra.mxu0 0.0
    %264 = vmatprep.subr.mxu0 0.0
    %265 = vmatpush1.msra.mxu0 0.0
    %266 = vmatprep.subr.mxu0 0.0
    %267 = vmatpush1.msra.mxu0 0.0
    %268 = vmatprep.subr.mxu0 0.0
    %269 = vmatpush1.msra.mxu0 0.0
    %270 = vmatprep.subr.mxu0 0.0
    %271 = vmatpush1.msra.mxu0 0.0
    %272 = vmatprep.subr.mxu0 0.0
    %273 = vmatpush1.msra.mxu0 0.0
    %274 = vmatprep.subr.mxu0 0.0
    %275 = vmatpush1.msra.mxu0 0.0
    %276 = vmatprep.subr.mxu0 0.0
    %277 = vmatpush1.msra.mxu0 0.0
    %278 = vmatprep.subr.mxu0 0.0
    %279 = vmatpush1.msra.mxu0 0.0
    %280 = vmatprep.subr.mxu0 0.0
    %281 = vmatpush1.msra.mxu0 0.0
    %282 = vmatprep.subr.mxu0 0.0
    %283 = vmatpush1.msra.mxu0 0.0
    %284 = vmatprep.subr.mxu0 0.0
    %285 = vmatpush1.msra.mxu0 0.0
    %286 = vmatprep.subr.mxu0 0.0
    %287 = vmatpush1.msra.mxu0 0.0
    %288 = vmatprep.subr.mxu0 0.0
    %289 = vmatpush1.msra.mxu0 0.0
    %290 = vmatprep.subr.mxu0 0.0
    %291 = vmatpush1.msra.mxu0 0.0
    %292 = vmatprep.subr.mxu0 0.0
    %293 = vmatpush1.msra.mxu0 0.0
    %294 = vmatprep.subr.mxu0 0.0
    %295 = vmatpush1.msra.mxu0 0.0
    %296 = vmatprep.subr.mxu0 0.0
    %297 = vmatpush1.msra.mxu0 0.0
    %298 = vmatprep.subr.mxu0 0.0
    %299 = vmatpush1.msra.mxu0 0.0
    %300 = vmatprep.subr.mxu0 0.0
    %301 = vmatpush1.msra.mxu0 0.0
    %302 = vmatprep.subr.mxu0 0.0
    %303 = vmatpush1.msra.mxu0 0.0
    %304 = vmatprep.subr.mxu0 0.0
    %305 = vmatpush1.msra.mxu0 0.0
    %306 = vmatprep.subr.mxu0 0.0
    %307 = vmatpush1.msra.mxu0 0.0
    %308 = vmatprep.mubr.f32.mxu0 0.0
    %309 = vmatmul.mubr.f32.gmra.mrb[0].mxu0 %v239
    %v310 = vpop.f32.mrb[0].mxu0
    %v311 = vadd.f32 %v236, %v310
    %v312 = vpop.f32.mrb[0].mxu0
    %313 = vmatprep.mubr.f32.mxu0 0.0
    %314 = vmatmul.mubr.f32.gmra.mrb[0].mxu0 %v242
    %v315 = vpop.f32.mrb[0].mxu0
    %v316 = vadd.f32 %v236, %v315
    %v317 = vpop.f32.mrb[0].mxu0
    %318 = vdwg.mxu0
    %vm319 = vcmask 130048
    %320 = vst.msk [vmem:[#allocation2] sm:$0xff] %vm319, %v311
    %321 = vst.msk [vmem:[#allocation2 + $0x8] sm:$0xff] %vm319, %v316
    // Predicated region
    $region26: #{tpu_custom_call.1} parent=1 // pred_check
      _
    $region27: #{tpu_custom_call.1} parent=1 // pred_check_branch
      %323 = sbr.rel (0) target = $region29
    $region28: #{tpu_custom_call.1} parent=1 // pred_region
      %s325 = ssub.s32 256, 256
      %326 = vsyncadd [#allocation3], %s325
      %s327 = sshll.u32 [#allocation2], 4
      %s328 = int_to_ptr.vmem [resolvable:$true] %s327
      %333 = dma.vmem_to_hbm [thread:$0]  %s328, 256, %s6, [#allocation3], 128, 128, 8
    $region29: #{tpu_custom_call.1} parent=1 // pred_fallthru
      _
    // Predicated region
    $region30: #{tpu_custom_call.1} parent=1 // pred_check
      _
    $region31: #{tpu_custom_call.1} parent=1 // pred_check_branch
      %335 = sbr.rel (0) target = $region33
    $region32: #{tpu_custom_call.1} parent=1 // pred_region
      %336 = dma.done [#allocation3], 256
    $region33: #{tpu_custom_call.1} parent=1 // pred_fallthru
      _
    %337 = vsyncpa [#allocation3], 1

</llo_original>
